<compile_context>
chip_gen: v5e
topology: v5e:2x2
jax: 0.10.0
libtpu: 0.0.40
codegen_flags: <defaults>
</compile_context>

<pallas_src>
import functools
import math

import jax
import jax.numpy as jnp
from jax.experimental import pallas as pl
from jax.experimental.pallas import tpu as pltpu


# ---------------------------------------------------------------------------
# Kernels
# ---------------------------------------------------------------------------

def _layernorm_kernel_lane(x_ref, gamma_ref, beta_ref, o_ref, *, eps, inv_d):
    """LayerNorm where the tile's last dim is exactly d_model (lane axis)."""
    x = x_ref[...].astype(jnp.float32)
    mean = jnp.sum(x, axis=-1, keepdims=True) * inv_d
    xc = x - mean
    # Centered second pass: x is already in vregs, compute is free under the
    # memory-bound regime, and it avoids E[x^2]-mean^2 cancellation.
    var = jnp.sum(xc * xc, axis=-1, keepdims=True) * inv_d
    inv = jax.lax.rsqrt(var + eps)
    # gamma/beta already f32 (cast hoisted to wrapper); implicit (1, D) broadcast.
    o_ref[...] = (xc * inv * gamma_ref[...] + beta_ref[...]).astype(o_ref.dtype)


def _layernorm_kernel_packed(x_ref, gamma_ref, beta_ref, seg_ref, o_ref, *, eps, inv_d):
    """LayerNorm where `pack` logical rows share one lane-dense physical row.

    Segmented sum + broadcast-back is a single (L, L) block-diagonal matmul on
    the MXU, keeping every load/store lane-dense and avoiding XLU reductions.
    Variance is computed on centered values (second seg matmul) for numerical
    robustness; the kernel is HBM-bound so the extra matmul is hidden.
    """
    x = x_ref[...].astype(jnp.float32)
    seg = seg_ref[...]
    mean = jnp.dot(x, seg, preferred_element_type=jnp.float32) * inv_d
    xc = x - mean
    # NOTE(v5e): if the MXU push/pop slot ever binds here, the two seg matmuls
    # can be fused by stacking [x ; xc*xc] as one LHS; not needed while HBM-bound.
    var = jnp.dot(xc * xc, seg, preferred_element_type=jnp.float32) * inv_d
    inv = jax.lax.rsqrt(var + eps)
    o_ref[...] = (xc * inv * gamma_ref[...] + beta_ref[...]).astype(o_ref.dtype)


# ---------------------------------------------------------------------------
# Tiling heuristics
# ---------------------------------------------------------------------------

_SUBLANE = {4: 8, 2: 16, 1: 32}            # min sublane tile per element size
_TILE_TARGET_BYTES = 4 * 1024 * 1024       # ~4 MiB x blocks amortize per-step overhead
_MAX_PACKED_LANES = 512                    # cap packed lane_width at 4 vregs wide


def _round_up(x, m):
    return ((x + m - 1) // m) * m


def _round_down(x, m):
    return (x // m) * m


def _vmem_capacity_bytes():
    try:
        return int(pltpu.get_tpu_info().vmem_capacity_bytes)
    except Exception:
        return 64 * 1024 * 1024  # conservative fallback (v7x per-TC VMEM)


def _vmem_budgets():
    cap = _vmem_capacity_bytes()
    # Scoped limit: <= ~56 MiB on v7x (64 MiB physical), <= 100 MiB on v5e/v6e.
    vmem_limit = max(16 << 20, min(cap - (8 << 20), 100 << 20))
    # Budget for the double-buffered x/out DMA buffers (2 arrays x 2 buffers).
    dma_budget = int(vmem_limit * 0.7)
    return vmem_limit, dma_budget


def _pick_row_tile(rows, lane_width, itemsize, dma_budget):
    sub = _SUBLANE.get(itemsize, 8)
    if rows <= sub:
        # Cannot split below the sublane quantum: one full-extent block
        # (block dim == array dim is legal). grid=(1,) is unavoidable here.
        return rows
    # Hard cap: x + out double-buffered must fit the DMA budget.
    cap = max(sub, _round_down(dma_budget // (4 * lane_width * itemsize), sub))
    # Byte-budgeted target: ~4 MiB per x block.
    target = max(sub, _round_down(_TILE_TARGET_BYTES // (lane_width * itemsize), sub))
    tm = min(cap, target)
    # Only shrink enough to guarantee >= 2 grid steps (v7x megacore / pipelining);
    # do NOT force many small tiles.
    if pl.cdiv(rows, tm) < 2:
        tm = max(sub, _round_up(pl.cdiv(rows, 2), sub))
    return min(tm, rows)


# ---------------------------------------------------------------------------
# Wrapper
# ---------------------------------------------------------------------------

def layer_norm(x, gamma, beta, eps=1e-12):
    # NOTE: eps=1e-12 matches the reference PyTorch module's default (not
    # torch.nn.LayerNorm's 1e-5).
    orig_shape = x.shape
    d_model = orig_shape[-1]
    rows = math.prod(orig_shape[:-1]) if len(orig_shape) > 1 else 1

    # Lane-density: if d_model is smaller than the 128-lane vreg width, pack
    # several consecutive rows into one lane-dense physical row (lane_width a
    # multiple of 128). Rows are padded to a multiple of `pack` if needed; the
    # reshape itself is free (row-major contiguous).
    pack = 1
    if d_model < 128:
        lane_target = math.lcm(d_model, 128)
        if lane_target <= _MAX_PACKED_LANES:
            pack = lane_target // d_model
    lane_width = d_model * pack

    x2 = x.reshape(rows, d_model)
    rows_pad = _round_up(rows, pack)
    if rows_pad != rows:
        # Zero padding: mean=0, var=0 -> rsqrt(eps), no NaNs on padded rows.
        x2 = jnp.pad(x2, ((0, rows_pad - rows), (0, 0)))
    rows_p = rows_pad // pack
    x2 = x2.reshape(rows_p, lane_width)

    gamma2 = jnp.tile(gamma.astype(jnp.float32).reshape(1, d_model), (1, pack))
    beta2 = jnp.tile(beta.astype(jnp.float32).reshape(1, d_model), (1, pack))

    itemsize = jnp.dtype(x.dtype).itemsize
    vmem_limit, dma_budget = _vmem_budgets()
    tm = _pick_row_tile(rows_p, lane_width, itemsize, dma_budget)
    # Partial tail block is fine: rows are independent; garbage padded rows in
    # the tail compute a harmless rsqrt and are masked on writeback.
    grid = (pl.cdiv(rows_p, tm),)
    inv_d = 1.0 / d_model

    x_spec = pl.BlockSpec((tm, lane_width), lambda i: (i, 0))
    # For small problems where tiles cannot grow, deepen the input pipeline so
    # DMA latency isn't exposed behind the default 2-deep pipeline.
    if tm * lane_width * itemsize < (1 << 20) and grid[0] > 3:
        try:
            x_spec = pl.BlockSpec((tm, lane_width), lambda i: (i, 0),
                                  pipeline_mode=pl.Buffered(3))
        except TypeError:
            pass  # older BlockSpec without pipeline_mode: keep default
    vec_spec = pl.BlockSpec((1, lane_width), lambda i: (0, 0))
    out_spec = pl.BlockSpec((tm, lane_width), lambda i: (i, 0))

    compiler_params = pltpu.CompilerParams(
        dimension_semantics=("parallel",),
        vmem_limit_bytes=vmem_limit,
    )
    cost_estimate = pl.CostEstimate(
        flops=10 * rows_pad * d_model,
        transcendentals=rows_pad,
        bytes_accessed=2 * rows_pad * d_model * itemsize,
    )

    if pack > 1:
        seg_id = jnp.arange(lane_width, dtype=jnp.int32) // d_model
        seg = (seg_id[:, None] == seg_id[None, :]).astype(jnp.float32)
        kernel = functools.partial(_layernorm_kernel_packed, eps=eps, inv_d=inv_d)
        in_specs = [x_spec, vec_spec, vec_spec,
                    pl.BlockSpec((lane_width, lane_width), lambda i: (0, 0))]
        args = (x2, gamma2, beta2, seg)
    else:
        kernel = functools.partial(_layernorm_kernel_lane, eps=eps, inv_d=inv_d)
        in_specs = [x_spec, vec_spec, vec_spec]
        args = (x2, gamma2, beta2)

    out = pl.pallas_call(
        kernel,
        out_shape=jax.ShapeDtypeStruct((rows_p, lane_width), x.dtype),
        grid_spec=pltpu.PrefetchScalarGridSpec(
            num_scalar_prefetch=0,
            grid=grid,
            in_specs=in_specs,
            out_specs=out_spec,
        ),
        compiler_params=compiler_params,
        cost_estimate=cost_estimate,
    )(*args)

    out = out.reshape(rows_pad, d_model)
    if rows_pad != rows:
        out = out[:rows]
    return out.reshape(orig_shape)


def layer_norm_ref(x, gamma, beta, eps=1e-12):
    xf = x.astype(jnp.float32)
    mean = jnp.mean(xf, axis=-1, keepdims=True)
    var = jnp.mean((xf - mean) ** 2, axis=-1, keepdims=True)
    out = (xf - mean) / jnp.sqrt(var + eps)
    return (gamma * out + beta).astype(x.dtype)


if __name__ == "__main__":
    key = jax.random.PRNGKey(0)
    batch, seq, d_model = 2, 8, 32

    x = jax.random.normal(key, (batch, seq, d_model), dtype=jnp.float32)
    # Deterministic parameter init matching nn.Parameter(torch.ones/zeros(d_model)).
    gamma = jnp.ones((d_model,), dtype=jnp.float32)
    beta = jnp.zeros((d_model,), dtype=jnp.float32)

    out = layer_norm(x, gamma, beta)
    out = jax.block_until_ready(out)

    ref = layer_norm_ref(x, gamma, beta)
    assert out.shape == x.shape
    assert jnp.allclose(out, ref, atol=1e-5, rtol=1e-5)

    print("KERNEL_OK")
</pallas_src>

<mosaic_0001>
module attributes {stable_mosaic.version = 11 : i64} {
  func.func @_layernorm_kernel_packed(%arg0: i32, %arg1: memref<4x128xf32, #tpu.memory_space<vmem>>, %arg2: memref<1x128xf32, #tpu.memory_space<vmem>>, %arg3: memref<1x128xf32, #tpu.memory_space<vmem>>, %arg4: memref<128x128xf32, #tpu.memory_space<vmem>>, %arg5: memref<4x128xf32, #tpu.memory_space<vmem>>) attributes {dimension_semantics = [#tpu.dimension_semantics<parallel>], iteration_bounds = array<i64: 1>, scalar_prefetch = 0 : i64, scratch_operands = 0 : i64, tpu.core_type = #tpu.core_type<tc>, window_params = [{transform_indices = @transform_0, window_bounds = array<i64: 4, 128>}, {pipeline_mode = #tpu.pipeline_mode<synchronous>, transform_indices = @transform_1, window_bounds = array<i64: 1, 128>}, {pipeline_mode = #tpu.pipeline_mode<synchronous>, transform_indices = @transform_2, window_bounds = array<i64: 1, 128>}, {pipeline_mode = #tpu.pipeline_mode<synchronous>, transform_indices = @transform_3, window_bounds = array<i64: 128, 128>}, {transform_indices = @transform_4, window_bounds = array<i64: 4, 128>}]} {
    %c0 = arith.constant 0 : index
    %c0_0 = arith.constant 0 : index
    %0 = vector.load %arg1[%c0, %c0_0] : memref<4x128xf32, #tpu.memory_space<vmem>>, vector<4x128xf32>
    %c0_1 = arith.constant 0 : index
    %c0_2 = arith.constant 0 : index
    %1 = vector.load %arg4[%c0_1, %c0_2] : memref<128x128xf32, #tpu.memory_space<vmem>>, vector<128x128xf32>
    %cst = arith.constant dense<0.000000e+00> : vector<4x128xf32>
    %2 = tpu.matmul %0, %1, %cst {dimension_numbers = #tpu.dot_dimension_numbers<[1], [0], [0], [1], [0, 0, 1, 1], [], []>} : vector<4x128xf32>, vector<128x128xf32>, vector<4x128xf32> -> vector<4x128xf32>
    %cst_3 = arith.constant 3.125000e-02 : f32
    %3 = vector.broadcast %cst_3 : f32 to vector<4x128xf32>
    %4 = arith.mulf %2, %3 : vector<4x128xf32>
    %5 = arith.subf %0, %4 : vector<4x128xf32>
    %6 = arith.mulf %5, %5 : vector<4x128xf32>
    %cst_4 = arith.constant dense<0.000000e+00> : vector<4x128xf32>
    %7 = tpu.matmul %6, %1, %cst_4 {dimension_numbers = #tpu.dot_dimension_numbers<[1], [0], [0], [1], [0, 0, 1, 1], [], []>} : vector<4x128xf32>, vector<128x128xf32>, vector<4x128xf32> -> vector<4x128xf32>
    %cst_5 = arith.constant 3.125000e-02 : f32
    %8 = vector.broadcast %cst_5 : f32 to vector<4x128xf32>
    %9 = arith.mulf %7, %8 : vector<4x128xf32>
    %cst_6 = arith.constant 9.99999996E-13 : f32
    %10 = vector.broadcast %cst_6 : f32 to vector<4x128xf32>
    %11 = arith.addf %9, %10 : vector<4x128xf32>
    %12 = math.rsqrt %11 : vector<4x128xf32>
    %13 = arith.mulf %5, %12 : vector<4x128xf32>
    %c0_7 = arith.constant 0 : index
    %c0_8 = arith.constant 0 : index
    %14 = vector.load %arg2[%c0_7, %c0_8] : memref<1x128xf32, #tpu.memory_space<vmem>>, vector<1x128xf32>
    %15 = vector.broadcast %14 : vector<1x128xf32> to vector<4x128xf32>
    %16 = arith.mulf %13, %15 : vector<4x128xf32>
    %c0_9 = arith.constant 0 : index
    %c0_10 = arith.constant 0 : index
    %17 = vector.load %arg3[%c0_9, %c0_10] : memref<1x128xf32, #tpu.memory_space<vmem>>, vector<1x128xf32>
    %18 = vector.broadcast %17 : vector<1x128xf32> to vector<4x128xf32>
    %19 = arith.addf %16, %18 : vector<4x128xf32>
    %c0_11 = arith.constant 0 : index
    %c0_12 = arith.constant 0 : index
    %20 = vector.load %arg5[%c0_11, %c0_12] : memref<4x128xf32, #tpu.memory_space<vmem>>, vector<4x128xf32>
    tpu.vector_store %arg5[%c0_11, %c0_12], %19 {strides = array<i32>} : memref<4x128xf32, #tpu.memory_space<vmem>>, vector<4x128xf32>,
    return
  }
  func.func @transform_0(%arg0: i32) -> (i32, i32) {
    %c0_i32 = arith.constant 0 : i32
    %c0_i32_0 = arith.constant 0 : i32
    return %arg0, %c0_i32 : i32, i32
  }
  func.func @transform_1(%arg0: i32) -> (i32, i32) {
    %c0_i32 = arith.constant 0 : i32
    %c0_i32_0 = arith.constant 0 : i32
    %c0_i32_1 = arith.constant 0 : i32
    return %c0_i32, %c0_i32_0 : i32, i32
  }
  func.func @transform_2(%arg0: i32) -> (i32, i32) {
    %c0_i32 = arith.constant 0 : i32
    %c0_i32_0 = arith.constant 0 : i32
    %c0_i32_1 = arith.constant 0 : i32
    return %c0_i32, %c0_i32_0 : i32, i32
  }
  func.func @transform_3(%arg0: i32) -> (i32, i32) {
    %c0_i32 = arith.constant 0 : i32
    %c0_i32_0 = arith.constant 0 : i32
    %c0_i32_1 = arith.constant 0 : i32
    return %c0_i32, %c0_i32_0 : i32, i32
  }
  func.func @transform_4(%arg0: i32) -> (i32, i32) {
    %c0_i32 = arith.constant 0 : i32
    %c0_i32_0 = arith.constant 0 : i32
    return %arg0, %c0_i32 : i32, i32
  }
}

</mosaic_0001>

<llo_original>
// kernel: tpu_custom_call.1
$region0: #{tpu_custom_call.1}
  #allocation0 [shape = 'u32[]', space=smem, size = 0x4, offset = 0x4, fixed_abs, tag = 'smem constant byte address 0x4 - core index']
  #allocation1 [shape = 'u32[72,128]{1,0:T(1,128)}', space=vmem, size = 0x9000, scoped, tag = 'internal scratch']
  %s0 = inlined_call_operand.hbm [shape: f32[4,128], index: 0, kind: input, shape index: {}]
  %s1 = inlined_call_operand.hbm [shape: f32[1,128], index: 1, kind: input, shape index: {}]
  %s2 = inlined_call_operand.vmem [shape: f32[1,128], index: 2, kind: input, shape index: {}]
  %s3 = inlined_call_operand.hbm [shape: f32[128,128], index: 3, kind: input, shape index: {}]
  %s4 = inlined_call_operand.hbm [shape: f32[4,128], index: 4, kind: output, shape index: {}]
  %s5 = sld [smem:[#allocation0]]
  $region38: #{tpu_custom_call.1} parent=0
    _
  %s7 = ssub.s32 1, %s5
  %s8 = scalar_select 0, %s7, %s5
  $region1: #{tpu_custom_call.1} parent=0
    #allocation2 [shape = 'u8[2048]{0}', space=vmem, size = 0x800, scoped, tag = 'input window, operand 0, single buffered']
    #allocation3 [shape = 's32[1]{0}', space=sflag, size = 0x4, scoped, tag = 'scoped memory for tpu_custom_call.1']
    #allocation4 [shape = 's32[1]{0}', space=sflag, size = 0x4, scoped, tag = 'scoped memory for tpu_custom_call.1']
    #allocation5 [shape = 'u8[512]{0}', space=vmem, size = 0x400, scoped, tag = 'input window, operand 1, single buffered']
    #allocation6 [shape = 's32[1]{0}', space=sflag, size = 0x4, scoped, tag = 'scoped memory for tpu_custom_call.1']
    #allocation7 [shape = 'u8[65536]{0}', space=vmem, size = 0x10000, scoped, tag = 'input window, operand 3, single buffered']
    #allocation8 [shape = 'u8[2048]{0}', space=vmem, size = 0x800, scoped, tag = 'output window, operand 0, single buffered']
    %9 = vsyncpa [#allocation3], 0
    %10 = vsyncpa [#allocation6], 0
    %11 = vsyncpa [#allocation4], 0
    // Predicated region
    $region2: #{tpu_custom_call.1} parent=1 // pred_check
      _
    $region3: #{tpu_custom_call.1} parent=1 // pred_check_branch
      %13 = sbr.rel (0) target = $region5
    $region4: #{tpu_custom_call.1} parent=1 // pred_region
      %15 = vsyncadd [#allocation3], 0
      %s17 = sshll.u32 %s0, 4
      %s18 = int_to_ptr.hbm [resolvable:$true] %s17
      %s19 = sshll.u32 [#allocation2], 4
      %s20 = int_to_ptr.vmem [resolvable:$true] %s19
      %22 = dma.hbm_to_vmem [thread:$0]  %s18, 64, %s20, [#allocation3]
    $region5: #{tpu_custom_call.1} parent=1 // pred_fallthru
      _
    // Predicated region
    $region6: #{tpu_custom_call.1} parent=1 // pred_check
      _
    $region7: #{tpu_custom_call.1} parent=1 // pred_check_branch
      %24 = sbr.rel (0) target = $region9
    $region8: #{tpu_custom_call.1} parent=1 // pred_region
      %26 = vsyncadd [#allocation6], 0
      %s28 = sshll.u32 %s1, 4
      %s29 = int_to_ptr.hbm [resolvable:$true] %s28
      %s30 = sshll.u32 [#allocation5], 4
      %s31 = int_to_ptr.vmem [resolvable:$true] %s30
      %33 = dma.hbm_to_vmem [thread:$0]  %s29, 16, %s31, [#allocation6]
    $region9: #{tpu_custom_call.1} parent=1 // pred_fallthru
      _
    // Predicated region
    $region10: #{tpu_custom_call.1} parent=1 // pred_check
      _
    $region11: #{tpu_custom_call.1} parent=1 // pred_check_branch
      %35 = sbr.rel (0) target = $region13
    $region12: #{tpu_custom_call.1} parent=1 // pred_region
      _
    $region13: #{tpu_custom_call.1} parent=1 // pred_fallthru
      _
    // Predicated region
    $region14: #{tpu_custom_call.1} parent=1 // pred_check
      _
    $region15: #{tpu_custom_call.1} parent=1 // pred_check_branch
      %37 = sbr.rel (0) target = $region17
    $region16: #{tpu_custom_call.1} parent=1 // pred_region
      %39 = vsyncadd [#allocation6], 0
      %s40 = sshll.u32 %s3, 4
      %s41 = int_to_ptr.hbm [resolvable:$true] %s40
      %s42 = sshll.u32 [#allocation7], 4
      %s43 = int_to_ptr.vmem [resolvable:$true] %s42
      %48 = dma.hbm_to_vmem [thread:$0]  %s41, 2048, %s43, [#allocation6], 128, 128, 8
    $region17: #{tpu_custom_call.1} parent=1 // pred_fallthru
      _
    // Predicated region
    $region18: #{tpu_custom_call.1} parent=1 // pred_check
      _
    $region19: #{tpu_custom_call.1} parent=1 // pred_check_branch
      %50 = sbr.rel (0) target = $region21
    $region20: #{tpu_custom_call.1} parent=1 // pred_region
      %52 = dma.done [#allocation3], 64
    $region21: #{tpu_custom_call.1} parent=1 // pred_fallthru
      _
    // Predicated region
    $region22: #{tpu_custom_call.1} parent=1 // pred_check
      _
    $region23: #{tpu_custom_call.1} parent=1 // pred_check_branch
      %54 = sbr.rel (0) target = $region25
    $region24: #{tpu_custom_call.1} parent=1 // pred_region
      %56 = dma.done [#allocation6], 16
    $region25: #{tpu_custom_call.1} parent=1 // pred_fallthru
      _
    // Predicated region
    $region26: #{tpu_custom_call.1} parent=1 // pred_check
      _
    $region27: #{tpu_custom_call.1} parent=1 // pred_check_branch
      %58 = sbr.rel (0) target = $region29
    $region28: #{tpu_custom_call.1} parent=1 // pred_region
      %60 = dma.done [#allocation6], 2048
    $region29: #{tpu_custom_call.1} parent=1 // pred_fallthru
      _
    %v61 = vld [vmem:[#allocation2] sm:$0xf]
    %v62 = vld [vmem:[#allocation7] sm:$0xff]
    %v63 = vld [vmem:[#allocation7 + $0x8] sm:$0xff]
    %v64 = vld [vmem:[#allocation7 + $0x10] sm:$0xff]
    %v65 = vld [vmem:[#allocation7 + $0x18] sm:$0xff]
    %v66 = vld [vmem:[#allocation7 + $0x20] sm:$0xff]
    %v67 = vld [vmem:[#allocation7 + $0x28] sm:$0xff]
    %v68 = vld [vmem:[#allocation7 + $0x30] sm:$0xff]
    %v69 = vld [vmem:[#allocation7 + $0x38] sm:$0xff]
    %v70 = vld [vmem:[#allocation7 + $0x40] sm:$0xff]
    %v71 = vld [vmem:[#allocation7 + $0x48] sm:$0xff]
    %v72 = vld [vmem:[#allocation7 + $0x50] sm:$0xff]
    %v73 = vld [vmem:[#allocation7 + $0x58] sm:$0xff]
    %v74 = vld [vmem:[#allocation7 + $0x60] sm:$0xff]
    %v75 = vld [vmem:[#allocation7 + $0x68] sm:$0xff]
    %v76 = vld [vmem:[#allocation7 + $0x70] sm:$0xff]
    %v77 = vld [vmem:[#allocation7 + $0x78] sm:$0xff]
    %78 = vmatpush.msra.mxu0 %v77
    %79 = vmatpush.msra.mxu0 %v76
    %80 = vmatpush.msra.mxu0 %v75
    %81 = vmatpush.msra.mxu0 %v74
    %82 = vmatpush.msra.mxu0 %v73
    %83 = vmatpush.msra.mxu0 %v72
    %84 = vmatpush.msra.mxu0 %v71
    %85 = vmatpush.msra.mxu0 %v70
    %86 = vmatpush.msra.mxu0 %v69
    %87 = vmatpush.msra.mxu0 %v68
    %88 = vmatpush.msra.mxu0 %v67
    %89 = vmatpush.msra.mxu0 %v66
    %90 = vmatpush.msra.mxu0 %v65
    %91 = vmatpush.msra.mxu0 %v64
    %92 = vmatpush.msra.mxu0 %v63
    %93 = vmatpush.msra.mxu0 %v62
    %94 = vmatmul.f32.gmra.mxu0 %v61
    %v95 = vpop.f32.mrf.mxu0
    %v96 = vadd.f32 0.0, %v95
    %97 = vdwg.mxu0
    %v98 = vmul.f32 %v96, 0.03125
    %v99 = vsub.f32 %v61, %v98
    %v100 = vmul.f32 %v99, %v99
    %101 = vmatpush.msra.mxu0 %v77
    %102 = vmatpush.msra.mxu0 %v76
    %103 = vmatpush.msra.mxu0 %v75
    %104 = vmatpush.msra.mxu0 %v74
    %105 = vmatpush.msra.mxu0 %v73
    %106 = vmatpush.msra.mxu0 %v72
    %107 = vmatpush.msra.mxu0 %v71
    %108 = vmatpush.msra.mxu0 %v70
    %109 = vmatpush.msra.mxu0 %v69
    %110 = vmatpush.msra.mxu0 %v68
    %111 = vmatpush.msra.mxu0 %v67
    %112 = vmatpush.msra.mxu0 %v66
    %113 = vmatpush.msra.mxu0 %v65
    %114 = vmatpush.msra.mxu0 %v64
    %115 = vmatpush.msra.mxu0 %v63
    %116 = vmatpush.msra.mxu0 %v62
    %117 = vmatmul.f32.gmra.mxu0 %v100
    %v118 = vpop.f32.mrf.mxu0
    %v119 = vadd.f32 0.0, %v118
    %120 = vdwg.mxu0
    %v121 = vmul.f32 %v119, 0.03125
    %v122 = vadd.f32 %v121, 1e-12
    %v123 = vrsqrt.pop %v122
    %v124 = vmul.f32 %v123, %v122
    %v125 = vmul.f32 %v124, %v123
    %v126 = vmul.f32 0.5, %v125
    %v127 = vsub.f32 1.5, %v126
    %v128 = vmul.f32 %v123, %v127
    %vm129 = vweird.f32 %v122
    %vm130 = vweird.f32 %v123
    %vm131 = vmor %vm129, %vm130
    %v132 = vsel %vm131, %v123, %v128
    %v133 = vmul.f32 %v99, %v132
    %v134 = vld [vmem:[#allocation5] sm:$0x1]
    %v136 = vperm.slane %v134, 0
    %v138 = vmul.f32 %v133, %v136
    %v139 = vld [vmem:[%s2] sm:$0x1]
    %v141 = vperm.slane %v139, 0
    %v143 = vadd.f32 %v138, %v141
    %144 = vst [vmem:[#allocation8] sm:$0xf] %v143
    // Predicated region
    $region30: #{tpu_custom_call.1} parent=1 // pred_check
      _
    $region31: #{tpu_custom_call.1} parent=1 // pred_check_branch
      %146 = sbr.rel (0) target = $region33
    $region32: #{tpu_custom_call.1} parent=1 // pred_region
      %148 = vsyncadd [#allocation4], 0
      %s150 = sshll.u32 [#allocation8], 4
      %s151 = int_to_ptr.vmem [resolvable:$true] %s150
      %s152 = sshll.u32 %s4, 4
      %s153 = int_to_ptr.hbm [resolvable:$true] %s152
      %155 = dma.vmem_to_hbm [thread:$0]  %s151, 64, %s153, [#allocation4]
    $region33: #{tpu_custom_call.1} parent=1 // pred_fallthru
      _
    // Predicated region
    $region34: #{tpu_custom_call.1} parent=1 // pred_check
      _
    $region35: #{tpu_custom_call.1} parent=1 // pred_check_branch
      %157 = sbr.rel (0) target = $region37
    $region36: #{tpu_custom_call.1} parent=1 // pred_region
      %159 = dma.done [#allocation4], 64
    $region37: #{tpu_custom_call.1} parent=1 // pred_fallthru
      _
    %160 = vsyncpa [#allocation3], 1
    %161 = vsyncpa [#allocation6], 1
    %162 = vsyncpa [#allocation4], 1

</llo_original>
